<compile_context>
chip_gen: v7x
topology: tpu7x:2x2x1
jax: 0.10.0
libtpu: 0.0.40
codegen_flags: <defaults>
</compile_context>

<pallas_src>
import functools
import math

import jax
import jax.numpy as jnp
from jax import lax
from jax.experimental import pallas as pl
from jax.experimental.pallas import tpu as pltpu


def _round_up(x, m):
    return (x + m - 1) // m * m


def _pick_tile(n, max_tile, align):
    """Aligned tile <= max_tile that covers n with minimal padding."""
    if n <= max_tile:
        return max(align, _round_up(n, align))
    ntiles = -(-n // max_tile)              # ceil
    return max(align, _round_up(-(-n // ntiles), align))


def _vmem_budget_bytes():
    """Usable VMEM budget (leaves headroom for compiler internals)."""
    try:
        cap = pltpu.get_tpu_info().vmem_capacity_bytes
    except Exception:
        cap = 64 * 1024 * 1024              # conservative (v7x per-TC)
    if cap >= 128 * 1024 * 1024:            # v5e / v6e
        return 96 * 1024 * 1024
    return 48 * 1024 * 1024                 # v7x (64 MiB physical)


def _arc_subcenter_kernel(f_ref, w_ref, o_ref, *, k):
    # f_ref: (TB, D)     pre-normalized features (dot dtype)
    # w_ref: (k, D, TC)  pre-normalized, pre-transposed weight tile (dot dtype)
    # o_ref: (TB, TC)    max-over-subcenter cosine
    f = f_ref[...]
    cos = None
    for j in range(k):                      # k small & static -> fully unrolled
        logits = lax.dot_general(
            f, w_ref[j],
            dimension_numbers=(((1,), (0,)), ((), ())),
            preferred_element_type=jnp.float32,
        )                                   # (TB, TC) f32 accumulation on MXU
        cos = logits if cos is None else jnp.maximum(cos, logits)
    o_ref[...] = cos.astype(o_ref.dtype)


def arc_margin_subcenter(features, weight, *, out_features, k,
                         block_b=None, block_c=None, use_bf16=True,
                         out_dtype=jnp.float32):
    """features: (B, in_features) f32; weight: (out_features*k, in_features) f32."""
    B, D = features.shape
    CK, D2 = weight.shape
    assert D == D2 and CK == out_features * k
    C = out_features
    eps = 1e-12

    dot_dtype = jnp.bfloat16 if use_bf16 else jnp.float32
    itemsize = 2 if use_bf16 else 4

    # ---------------- wrapper-side prep (runs once, outside the grid) -------
    # Feature normalization (rsqrt on squared norm), cast to the MXU dtype.
    f32 = features.astype(jnp.float32)
    sumsq = jnp.sum(f32 * f32, axis=-1, keepdims=True)
    f_n = (f32 * lax.rsqrt(jnp.maximum(sumsq, eps * eps))).astype(dot_dtype)

    # Weight: (C*k, D) -> (k, C, D); fold per-row inverse norms into the weight.
    w_r = weight.astype(jnp.float32).reshape(C, k, D).transpose(1, 0, 2)
    w_norm = jnp.sqrt(jnp.sum(w_r * w_r, axis=-1, keepdims=True))
    inv_w = jnp.where(w_norm > 0, 1.0 / jnp.maximum(w_norm, eps), 0.0)
    w_t = (w_r * inv_w).transpose(0, 2, 1)             # (k, D, C), normalized

    # ---------------- generation/dtype-aware tile selection ------------------
    budget = _vmem_budget_bytes()

    # Class tile: double-buffered weight block (2*k*D*tc*itemsize) <= ~55% budget.
    tc_cap = int((budget * 0.55) // (2 * k * D * itemsize)) // 128 * 128
    max_tc = min(2048, max(128, tc_cap))
    tc = block_c if block_c is not None else _pick_tile(C, max_tc, 128)
    tc = max(128, _round_up(tc, 128))

    # Batch tile: use the remaining VMEM (features + output double-buffered +
    # f32 intermediates), capped at 512 rows.
    rem = budget - 2 * k * D * tc * itemsize
    per_row = 2 * D * itemsize + 4 * tc * 4
    tb_cap = max(8, int(max(rem, 0) * 0.9 // per_row) // 8 * 8)
    max_tb = min(512, tb_cap)
    tb = block_b if block_b is not None else _pick_tile(B, max_tb, 8)
    tb = max(8, _round_up(tb, 8))

    B_pad = _round_up(B, tb)
    C_pad = _round_up(C, tc)

    f_p = f_n if B_pad == B else jnp.pad(f_n, ((0, B_pad - B), (0, 0)))
    w_p = w_t if C_pad == C else jnp.pad(w_t, ((0, 0), (0, 0), (0, C_pad - C)))
    w_mxu = w_p.astype(dot_dtype)                       # (k, D, C_pad)

    # ---------------- pallas_call ------------------------------------------
    n_c = C_pad // tc
    n_b = B_pad // tb
    cost = pl.CostEstimate(
        flops=int(2 * B_pad * C_pad * k * D),
        transcendentals=0,
        bytes_accessed=int(k * D * C_pad * itemsize      # weight read once
                           + n_c * B_pad * D * itemsize  # features re-streamed
                           + B_pad * C_pad * jnp.dtype(out_dtype).itemsize),
    )

    out = pl.pallas_call(
        functools.partial(_arc_subcenter_kernel, k=k),
        out_shape=jax.ShapeDtypeStruct((B_pad, C_pad), out_dtype),
        grid_spec=pltpu.PrefetchScalarGridSpec(
            num_scalar_prefetch=0,
            # Class axis leading (slow), batch axis inner (fast): the weight
            # block index is constant along the inner axis -> resident in VMEM.
            grid=(n_c, n_b),
            in_specs=[
                pl.BlockSpec((tb, D), lambda c, i: (i, 0)),        # features
                pl.BlockSpec((k, D, tc), lambda c, i: (0, 0, c)),  # weight (resident)
            ],
            out_specs=pl.BlockSpec((tb, tc), lambda c, i: (i, c)),
        ),
        compiler_params=pltpu.CompilerParams(
            dimension_semantics=("parallel", "parallel"),
            vmem_limit_bytes=int(budget),
        ),
        cost_estimate=cost,
    )(f_p, w_mxu)

    return out[:B, :C]


def _reference(features, weight, out_features, k):
    eps = 1e-12
    f_n = features / jnp.maximum(
        jnp.linalg.norm(features, axis=-1, keepdims=True), eps)
    w_n = weight / jnp.maximum(
        jnp.linalg.norm(weight, axis=-1, keepdims=True), eps)
    cosine_all = f_n @ w_n.T                      # (B, C*k)
    cosine_all = cosine_all.reshape(-1, out_features, k)
    return jnp.max(cosine_all, axis=2)


if __name__ == "__main__":
    in_features = 32
    out_features = 16
    k = 3
    batch = 10   # deliberately not a multiple of 8 -> exercises padding path

    key = jax.random.PRNGKey(0)
    k_feat, k_w = jax.random.split(key)

    features = jax.random.normal(k_feat, (batch, in_features), dtype=jnp.float32)

    # reset_parameters: uniform(-stdv, stdv), stdv = 1/sqrt(in_features)
    stdv = 1.0 / math.sqrt(in_features)
    weight = jax.random.uniform(
        k_w, (out_features * k, in_features),
        minval=-stdv, maxval=stdv, dtype=jnp.float32)

    ref = _reference(features, weight, out_features, k)

    # bf16 MXU path (default): cosines bounded by 1 -> loose tolerance.
    out_bf16 = arc_margin_subcenter(
        features, weight, out_features=out_features, k=k, use_bf16=True)
    out_bf16 = jax.block_until_ready(out_bf16)
    assert out_bf16.shape == (batch, out_features)
    assert jnp.allclose(out_bf16, ref, atol=2e-2, rtol=2e-2), "bf16 mismatch"

    # f32 path: tight tolerance vs reference.
    out_f32 = arc_margin_subcenter(
        features, weight, out_features=out_features, k=k, use_bf16=False)
    out_f32 = jax.block_until_ready(out_f32)
    assert out_f32.shape == (batch, out_features)
    assert jnp.allclose(out_f32, ref, atol=1e-5, rtol=1e-5), "f32 mismatch"

    print("KERNEL_OK")
</pallas_src>

<mosaic_0001>
module attributes {stable_mosaic.version = 11 : i64} {
  func.func @_arc_subcenter_kernel(%arg0: i32, %arg1: i32, %arg2: memref<16x32xbf16, #tpu.memory_space<vmem>>, %arg3: memref<3x32x128xbf16, #tpu.memory_space<vmem>>, %arg4: memref<16x128xf32, #tpu.memory_space<vmem>>) attributes {dimension_semantics = [#tpu.dimension_semantics<parallel>, #tpu.dimension_semantics<parallel>], iteration_bounds = array<i64: 1, 1>, scalar_prefetch = 0 : i64, scratch_operands = 0 : i64, tpu.core_type = #tpu.core_type<tc>, window_params = [{transform_indices = @transform_0, window_bounds = array<i64: 16, 32>}, {transform_indices = @transform_1, window_bounds = array<i64: 3, 32, 128>}, {transform_indices = @transform_2, window_bounds = array<i64: 16, 128>}]} {
    %c0 = arith.constant 0 : index
    %c0_0 = arith.constant 0 : index
    %0 = vector.load %arg2[%c0, %c0_0] : memref<16x32xbf16, #tpu.memory_space<vmem>>, vector<16x32xbf16>
    %c0_1 = arith.constant 0 : index
    %c0_2 = arith.constant 0 : index
    %c0_3 = arith.constant 0 : index
    %1 = vector.load %arg3[%c0_1, %c0_2, %c0_3] : memref<3x32x128xbf16, #tpu.memory_space<vmem>>, vector<1x32x128xbf16>
    %2 = vector.shape_cast %1 : vector<1x32x128xbf16> to vector<32x128xbf16>
    %cst = arith.constant dense<0.000000e+00> : vector<16x128xf32>
    %3 = tpu.matmul %0, %2, %cst {dimension_numbers = #tpu.dot_dimension_numbers<[1], [0], [0], [1], [0, 0, 1, 1], [], []>} : vector<16x32xbf16>, vector<32x128xbf16>, vector<16x128xf32> -> vector<16x128xf32>
    %c1 = arith.constant 1 : index
    %c0_4 = arith.constant 0 : index
    %c0_5 = arith.constant 0 : index
    %4 = vector.load %arg3[%c1, %c0_4, %c0_5] : memref<3x32x128xbf16, #tpu.memory_space<vmem>>, vector<1x32x128xbf16>
    %5 = vector.shape_cast %4 : vector<1x32x128xbf16> to vector<32x128xbf16>
    %cst_6 = arith.constant dense<0.000000e+00> : vector<16x128xf32>
    %6 = tpu.matmul %0, %5, %cst_6 {dimension_numbers = #tpu.dot_dimension_numbers<[1], [0], [0], [1], [0, 0, 1, 1], [], []>} : vector<16x32xbf16>, vector<32x128xbf16>, vector<16x128xf32> -> vector<16x128xf32>
    %7 = arith.maximumf %3, %6 : vector<16x128xf32>
    %c2 = arith.constant 2 : index
    %c0_7 = arith.constant 0 : index
    %c0_8 = arith.constant 0 : index
    %8 = vector.load %arg3[%c2, %c0_7, %c0_8] : memref<3x32x128xbf16, #tpu.memory_space<vmem>>, vector<1x32x128xbf16>
    %9 = vector.shape_cast %8 : vector<1x32x128xbf16> to vector<32x128xbf16>
    %cst_9 = arith.constant dense<0.000000e+00> : vector<16x128xf32>
    %10 = tpu.matmul %0, %9, %cst_9 {dimension_numbers = #tpu.dot_dimension_numbers<[1], [0], [0], [1], [0, 0, 1, 1], [], []>} : vector<16x32xbf16>, vector<32x128xbf16>, vector<16x128xf32> -> vector<16x128xf32>
    %11 = arith.maximumf %7, %10 : vector<16x128xf32>
    %c0_10 = arith.constant 0 : index
    %c0_11 = arith.constant 0 : index
    %12 = vector.load %arg4[%c0_10, %c0_11] : memref<16x128xf32, #tpu.memory_space<vmem>>, vector<16x128xf32>
    tpu.vector_store %arg4[%c0_10, %c0_11], %11 {strides = array<i32>} : memref<16x128xf32, #tpu.memory_space<vmem>>, vector<16x128xf32>,
    return
  }
  func.func @transform_0(%arg0: i32, %arg1: i32) -> (i32, i32) {
    %c0_i32 = arith.constant 0 : i32
    %c0_i32_0 = arith.constant 0 : i32
    return %arg1, %c0_i32 : i32, i32
  }
  func.func @transform_1(%arg0: i32, %arg1: i32) -> (i32, i32, i32) {
    %c0_i32 = arith.constant 0 : i32
    %c0_i32_0 = arith.constant 0 : i32
    %c0_i32_1 = arith.constant 0 : i32
    return %c0_i32, %c0_i32_0, %arg0 : i32, i32, i32
  }
  func.func @transform_2(%arg0: i32, %arg1: i32) -> (i32, i32) {
    %c0_i32 = arith.constant 0 : i32
    return %arg1, %arg0 : i32, i32
  }
}

</mosaic_0001>

<llo_original>
// kernel: tpu_custom_call.1
$region0: #{tpu_custom_call.1}
  #allocation0 [shape = 'u32[]', space=smem, size = 0x4, offset = 0x4, fixed_abs, tag = 'smem constant byte address 0x4 - core index']
  #allocation1 [shape = 'u32[144,128]{1,0:T(1,128)}', space=vmem, size = 0x12000, scoped, tag = 'internal scratch']
  %s0 = inlined_call_operand.hbm [shape: bf16[16,32], index: 0, kind: input, shape index: {}]
  %s1 = inlined_call_operand.hbm [shape: bf16[3,32,128], index: 1, kind: input, shape index: {}]
  %s2 = inlined_call_operand.hbm [shape: f32[16,128], index: 2, kind: output, shape index: {}]
  %s3 = sld [smem:[#allocation0]]
  $region26: #{tpu_custom_call.1} parent=0
    _
  %s5 = ssub.s32 1, %s3
  %s6 = scalar_select 0, %s5, %s3
  $region1: #{tpu_custom_call.1} parent=0
    #allocation2 [shape = 'u8[4096]{0}', space=vmem, size = 0x1000, scoped, tag = 'input window, operand 0, single buffered']
    #allocation3 [shape = 's32[1]{0}', space=sflag, size = 0x4, scoped, tag = 'scoped memory for tpu_custom_call.1']
    #allocation4 [shape = 's32[1]{0}', space=sflag, size = 0x4, scoped, tag = 'scoped memory for tpu_custom_call.1']
    #allocation5 [shape = 'u8[24576]{0}', space=vmem, size = 0x6000, scoped, tag = 'input window, operand 1, single buffered']
    #allocation6 [shape = 's32[1]{0}', space=sflag, size = 0x4, scoped, tag = 'scoped memory for tpu_custom_call.1']
    #allocation7 [shape = 'u8[8192]{0}', space=vmem, size = 0x2000, scoped, tag = 'output window, operand 0, single buffered']
    %7 = vsyncpa [#allocation3], 0
    %8 = vsyncpa [#allocation6], 0
    %9 = vsyncpa [#allocation4], 0
    // Predicated region
    $region2: #{tpu_custom_call.1} parent=1 // pred_check
      _
    $region3: #{tpu_custom_call.1} parent=1 // pred_check_branch
      %11 = sbr.rel (0) target = $region5
    $region4: #{tpu_custom_call.1} parent=1 // pred_region
      %s13 = ssub.s32 128, 128
      %14 = vsyncadd [#allocation3], %s13
      %s15 = sshll.u32 [#allocation2], 4
      %s16 = int_to_ptr.vmem [resolvable:$true] %s15
      %21 = dma.hbm_to_vmem [thread:$0]  %s0, 128, %s16, [#allocation3], 64, 64, 4
    $region5: #{tpu_custom_call.1} parent=1 // pred_fallthru
      _
    // Predicated region
    $region6: #{tpu_custom_call.1} parent=1 // pred_check
      _
    $region7: #{tpu_custom_call.1} parent=1 // pred_check_branch
      %23 = sbr.rel (0) target = $region9
    $region8: #{tpu_custom_call.1} parent=1 // pred_region
      %s25 = ssub.s32 768, 768
      %26 = vsyncadd [#allocation6], %s25
      %s27 = sshll.u32 [#allocation5], 4
      %s28 = int_to_ptr.vmem [resolvable:$true] %s27
      %33 = dma.hbm_to_vmem [thread:$0]  %s1, 768, %s28, [#allocation6], 64, 64, 4
    $region9: #{tpu_custom_call.1} parent=1 // pred_fallthru
      _
    // Predicated region
    $region10: #{tpu_custom_call.1} parent=1 // pred_check
      _
    $region11: #{tpu_custom_call.1} parent=1 // pred_check_branch
      %35 = sbr.rel (0) target = $region13
    $region12: #{tpu_custom_call.1} parent=1 // pred_region
      %36 = dma.done [#allocation3], 128
    $region13: #{tpu_custom_call.1} parent=1 // pred_fallthru
      _
    // Predicated region
    $region14: #{tpu_custom_call.1} parent=1 // pred_check
      _
    $region15: #{tpu_custom_call.1} parent=1 // pred_check_branch
      %38 = sbr.rel (0) target = $region17
    $region16: #{tpu_custom_call.1} parent=1 // pred_region
      %39 = dma.done [#allocation6], 768
    $region17: #{tpu_custom_call.1} parent=1 // pred_fallthru
      _
    %v41 = vld [vmem:[#allocation2] sm:$0xf]
    %v42 = vld [vmem:[#allocation2 + $0x4] sm:$0xf]
    %v43 = vld [vmem:[#allocation5] sm:$0xf]
    %v44 = vld [vmem:[#allocation5 + $0x4] sm:$0xf]
    %v45 = vld [vmem:[#allocation5 + $0x8] sm:$0xf]
    %v46 = vld [vmem:[#allocation5 + $0xc] sm:$0xf]
    %v49 = vunpack.c.l.b16 %v41
    %v50 = vunpack.c.l.b16 %v42
    %v51 = vpack.c.b16 %v50, %v49
    %v56 = vunpack.c.l.b16 %v43
    %v57 = vunpack.c.l.b16 %v44
    %v58 = vunpack.c.l.b16 %v45
    %v59 = vunpack.c.l.b16 %v46
    %v60 = vpack.c.b16 %v57, %v56
    %v61 = vpack.c.b16 %v59, %v58
    %vm64 = vcmask 261120
    %v66 = vsel %vm64, %v51, 0
    %68 = vmatprep.subr.bf16.mxu0 0
    %69 = vmatpush1.bf16.msra.mxu0 %v60
    %70 = vmatprep.subr.bf16.mxu0 0
    %71 = vmatpush1.bf16.msra.mxu0 %v61
    %72 = vmatprep.subr.bf16.mxu0 0
    %73 = vmatpush1.bf16.msra.mxu0 0
    %74 = vmatprep.subr.bf16.mxu0 0
    %75 = vmatpush1.bf16.msra.mxu0 0
    %76 = vmatprep.subr.bf16.mxu0 0
    %77 = vmatpush1.bf16.msra.mxu0 0
    %78 = vmatprep.subr.bf16.mxu0 0
    %79 = vmatpush1.bf16.msra.mxu0 0
    %80 = vmatprep.subr.bf16.mxu0 0
    %81 = vmatpush1.bf16.msra.mxu0 0
    %82 = vmatprep.subr.bf16.mxu0 0
    %83 = vmatpush1.bf16.msra.mxu0 0
    %84 = vmatprep.subr.bf16.mxu0 0
    %85 = vmatpush1.bf16.msra.mxu0 0
    %86 = vmatprep.subr.bf16.mxu0 0
    %87 = vmatpush1.bf16.msra.mxu0 0
    %88 = vmatprep.subr.bf16.mxu0 0
    %89 = vmatpush1.bf16.msra.mxu0 0
    %90 = vmatprep.subr.bf16.mxu0 0
    %91 = vmatpush1.bf16.msra.mxu0 0
    %92 = vmatprep.subr.bf16.mxu0 0
    %93 = vmatpush1.bf16.msra.mxu0 0
    %94 = vmatprep.subr.bf16.mxu0 0
    %95 = vmatpush1.bf16.msra.mxu0 0
    %96 = vmatprep.subr.bf16.mxu0 0
    %97 = vmatpush1.bf16.msra.mxu0 0
    %98 = vmatprep.subr.bf16.mxu0 0
    %99 = vmatpush1.bf16.msra.mxu0 0
    %100 = vmatprep.mubr.bf16.mxu0 0
    %101 = vmatmul.mubr.bf16.gmra.mrb[0].mxu0 %v66
    %v102 = vpop.f32.mrb[0].mxu0
    %v103 = vadd.f32 0.0, %v102
    %v104 = vpop.f32.mrb[0].mxu0
    %v105 = vpop.f32.mrb[0].mxu0
    %v106 = vadd.f32 0.0, %v105
    %v107 = vpop.f32.mrb[0].mxu0
    %108 = vdwg.mxu0
    %s109 = scalar_lea.vmem [#allocation5], 16
    %v110 = vld [vmem:[%s109] sm:$0xf]
    %v111 = vld [vmem:[%s109 + $0x4] sm:$0xf]
    %v112 = vld [vmem:[%s109 + $0x8] sm:$0xf]
    %v113 = vld [vmem:[%s109 + $0xc] sm:$0xf]
    %v118 = vunpack.c.l.b16 %v110
    %v119 = vunpack.c.l.b16 %v111
    %v120 = vunpack.c.l.b16 %v112
    %v121 = vunpack.c.l.b16 %v113
    %v122 = vpack.c.b16 %v119, %v118
    %v123 = vpack.c.b16 %v121, %v120
    %126 = vmatprep.subr.bf16.mxu0 0
    %127 = vmatpush1.bf16.msra.mxu0 %v122
    %128 = vmatprep.subr.bf16.mxu0 0
    %129 = vmatpush1.bf16.msra.mxu0 %v123
    %130 = vmatprep.subr.bf16.mxu0 0
    %131 = vmatpush1.bf16.msra.mxu0 0
    %132 = vmatprep.subr.bf16.mxu0 0
    %133 = vmatpush1.bf16.msra.mxu0 0
    %134 = vmatprep.subr.bf16.mxu0 0
    %135 = vmatpush1.bf16.msra.mxu0 0
    %136 = vmatprep.subr.bf16.mxu0 0
    %137 = vmatpush1.bf16.msra.mxu0 0
    %138 = vmatprep.subr.bf16.mxu0 0
    %139 = vmatpush1.bf16.msra.mxu0 0
    %140 = vmatprep.subr.bf16.mxu0 0
    %141 = vmatpush1.bf16.msra.mxu0 0
    %142 = vmatprep.subr.bf16.mxu0 0
    %143 = vmatpush1.bf16.msra.mxu0 0
    %144 = vmatprep.subr.bf16.mxu0 0
    %145 = vmatpush1.bf16.msra.mxu0 0
    %146 = vmatprep.subr.bf16.mxu0 0
    %147 = vmatpush1.bf16.msra.mxu0 0
    %148 = vmatprep.subr.bf16.mxu0 0
    %149 = vmatpush1.bf16.msra.mxu0 0
    %150 = vmatprep.subr.bf16.mxu0 0
    %151 = vmatpush1.bf16.msra.mxu0 0
    %152 = vmatprep.subr.bf16.mxu0 0
    %153 = vmatpush1.bf16.msra.mxu0 0
    %154 = vmatprep.subr.bf16.mxu0 0
    %155 = vmatpush1.bf16.msra.mxu0 0
    %156 = vmatprep.subr.bf16.mxu0 0
    %157 = vmatpush1.bf16.msra.mxu0 0
    %158 = vmatprep.mubr.bf16.mxu0 0
    %159 = vmatmul.mubr.bf16.gmra.mrb[0].mxu0 %v66
    %v160 = vpop.f32.mrb[0].mxu0
    %v161 = vadd.f32 0.0, %v160
    %v162 = vpop.f32.mrb[0].mxu0
    %v163 = vpop.f32.mrb[0].mxu0
    %v164 = vadd.f32 0.0, %v163
    %v165 = vpop.f32.mrb[0].mxu0
    %166 = vdwg.mxu0
    %v167 = vmax.f32 %v103, %v161
    %v168 = vmax.f32 %v106, %v164
    %s169 = scalar_lea.vmem [#allocation5], 32
    %v170 = vld [vmem:[%s169] sm:$0xf]
    %v171 = vld [vmem:[%s169 + $0x4] sm:$0xf]
    %v172 = vld [vmem:[%s169 + $0x8] sm:$0xf]
    %v173 = vld [vmem:[%s169 + $0xc] sm:$0xf]
    %v178 = vunpack.c.l.b16 %v170
    %v179 = vunpack.c.l.b16 %v171
    %v180 = vunpack.c.l.b16 %v172
    %v181 = vunpack.c.l.b16 %v173
    %v182 = vpack.c.b16 %v179, %v178
    %v183 = vpack.c.b16 %v181, %v180
    %186 = vmatprep.subr.bf16.mxu0 0
    %187 = vmatpush1.bf16.msra.mxu0 %v182
    %188 = vmatprep.subr.bf16.mxu0 0
    %189 = vmatpush1.bf16.msra.mxu0 %v183
    %190 = vmatprep.subr.bf16.mxu0 0
    %191 = vmatpush1.bf16.msra.mxu0 0
    %192 = vmatprep.subr.bf16.mxu0 0
    %193 = vmatpush1.bf16.msra.mxu0 0
    %194 = vmatprep.subr.bf16.mxu0 0
    %195 = vmatpush1.bf16.msra.mxu0 0
    %196 = vmatprep.subr.bf16.mxu0 0
    %197 = vmatpush1.bf16.msra.mxu0 0
    %198 = vmatprep.subr.bf16.mxu0 0
    %199 = vmatpush1.bf16.msra.mxu0 0
    %200 = vmatprep.subr.bf16.mxu0 0
    %201 = vmatpush1.bf16.msra.mxu0 0
    %202 = vmatprep.subr.bf16.mxu0 0
    %203 = vmatpush1.bf16.msra.mxu0 0
    %204 = vmatprep.subr.bf16.mxu0 0
    %205 = vmatpush1.bf16.msra.mxu0 0
    %206 = vmatprep.subr.bf16.mxu0 0
    %207 = vmatpush1.bf16.msra.mxu0 0
    %208 = vmatprep.subr.bf16.mxu0 0
    %209 = vmatpush1.bf16.msra.mxu0 0
    %210 = vmatprep.subr.bf16.mxu0 0
    %211 = vmatpush1.bf16.msra.mxu0 0
    %212 = vmatprep.subr.bf16.mxu0 0
    %213 = vmatpush1.bf16.msra.mxu0 0
    %214 = vmatprep.subr.bf16.mxu0 0
    %215 = vmatpush1.bf16.msra.mxu0 0
    %216 = vmatprep.subr.bf16.mxu0 0
    %217 = vmatpush1.bf16.msra.mxu0 0
    %218 = vmatprep.mubr.bf16.mxu0 0
    %219 = vmatmul.mubr.bf16.gmra.mrb[0].mxu0 %v66
    %v220 = vpop.f32.mrb[0].mxu0
    %v221 = vadd.f32 0.0, %v220
    %v222 = vpop.f32.mrb[0].mxu0
    %v223 = vpop.f32.mrb[0].mxu0
    %v224 = vadd.f32 0.0, %v223
    %v225 = vpop.f32.mrb[0].mxu0
    %226 = vdwg.mxu0
    %v227 = vmax.f32 %v167, %v221
    %v228 = vmax.f32 %v168, %v224
    %229 = vst [vmem:[#allocation7] sm:$0xff] %v227
    %230 = vst [vmem:[#allocation7 + $0x8] sm:$0xff] %v228
    // Predicated region
    $region18: #{tpu_custom_call.1} parent=1 // pred_check
      _
    $region19: #{tpu_custom_call.1} parent=1 // pred_check_branch
      %232 = sbr.rel (0) target = $region21
    $region20: #{tpu_custom_call.1} parent=1 // pred_region
      %s234 = ssub.s32 256, 256
      %235 = vsyncadd [#allocation4], %s234
      %s236 = sshll.u32 [#allocation7], 4
      %s237 = int_to_ptr.vmem [resolvable:$true] %s236
      %242 = dma.vmem_to_hbm [thread:$0]  %s237, 256, %s2, [#allocation4], 128, 128, 8
    $region21: #{tpu_custom_call.1} parent=1 // pred_fallthru
      _
    // Predicated region
    $region22: #{tpu_custom_call.1} parent=1 // pred_check
      _
    $region23: #{tpu_custom_call.1} parent=1 // pred_check_branch
      %244 = sbr.rel (0) target = $region25
    $region24: #{tpu_custom_call.1} parent=1 // pred_region
      %245 = dma.done [#allocation4], 256
    $region25: #{tpu_custom_call.1} parent=1 // pred_fallthru
      _
    %246 = vsyncpa [#allocation3], 1
    %247 = vsyncpa [#allocation6], 1
    %248 = vsyncpa [#allocation4], 1

</llo_original>
